<compile_context>
chip_gen: v7x
topology: tpu7x:2x2x1
jax: 0.10.0
libtpu: 0.0.40
codegen_flags: <defaults>
</compile_context>

<pallas_src>
import functools

import jax
import jax.numpy as jnp
from jax.experimental import pallas as pl
from jax.experimental.pallas import tpu as pltpu


def _label_smoothing_kernel(x_ref, tgt_ref, out_ref, *,
                            confidence, smoothing, n_rows, tile_n, num_tiles):
    """One batch tile: writes the tile's partial loss sum into out_ref[0, 0]."""
    x = x_ref[...].astype(jnp.float32)            # (tile_n, C); bf16 inputs cast here
    # TODO(synk): on v6e/v7x with bf16 logits, keep the max / weighted-sum passes in
    #             bf16 (cast only the exp/log path to f32) to halve vld + temp bytes.
    tgt = tgt_ref[...]                            # (tile_n, 1) int32
    c = x.shape[-1]

    # Row-wise stable logsumexp (XLU max + one EUP exp pass + XLU sum).
    m = jnp.max(x, axis=-1, keepdims=True)
    lse = jnp.log(jnp.sum(jnp.exp(x - m), axis=-1, keepdims=True)) + m   # (tile_n, 1)

    # Fused target-gather + class-mean reduction:
    #   w = smoothing/C everywhere, plus `confidence` on the target column, so
    #   sum(x*w) = confidence*x[tgt] + smoothing*mean(x)   (confidence+smoothing = 1).
    sm_pc = smoothing / c
    col = jax.lax.broadcasted_iota(jnp.int32, x.shape, 1)
    w = jnp.where(col == tgt, confidence + sm_pc, sm_pc)
    weighted = jnp.sum(x * w, axis=-1, keepdims=True)                    # (tile_n, 1)
    loss = lse - weighted                                                # (tile_n, 1)

    def _write(partial_11):
        out_ref[...] = jnp.zeros_like(out_ref)    # lane-dense (8, 128) block
        out_ref[0:1, 0:1] = partial_11

    ragged = (n_rows % tile_n) != 0               # static
    if not ragged:
        _write(jnp.sum(loss, keepdims=True))
    else:
        i = pl.program_id(0)
        last = num_tiles - 1
        rows_in_last = n_rows - last * tile_n     # static

        @pl.when(i != last)
        def _full_tile():
            _write(jnp.sum(loss, keepdims=True))

        @pl.when(i == last)
        def _last_tile():
            # Padding rows of the last block hold unspecified data (possibly
            # NaN/Inf); a SELECT discards them before the reduction.
            row = jax.lax.broadcasted_iota(jnp.int32, loss.shape, 0)
            masked = jnp.where(row < rows_in_last, loss, 0.0)
            _write(jnp.sum(masked, keepdims=True))


def label_smoothing_loss(x, target, smoothing=0.01, *, tile_n=None,
                         vmem_limit_bytes=32 * 1024 * 1024):
    """x: (N, C) float logits (f32 or bf16), target: (N,) int class indices -> scalar."""
    n, c = x.shape
    confidence = 1.0 - smoothing
    tgt2d = target.astype(jnp.int32).reshape(n, 1)

    if tile_n is None:
        # ~4 MiB f32 working block, sized from the f32 footprint regardless of input
        # dtype (fits v7x's 64 MiB VMEM with double buffering, >= HBM-roofline size).
        budget_rows = max(8, (4 * 1024 * 1024) // (c * 4))
        tile_n = max(8, (budget_rows // 8) * 8)
    else:
        tile_n = max(8, ((int(tile_n) + 7) // 8) * 8)   # sublane-multiple (correctness)
    if tile_n >= n:
        tile_n = n          # single tile: block spans the full batch dimension
    num_tiles = pl.cdiv(n, tile_n)
    # TODO(synk): for vocabulary-scale C that does not fit VMEM even at tile_n=8, add a
    #             trailing grid axis over C with an online-logsumexp carry.
    # TODO(synk): for tiny inputs (e.g. 8x32) the pure-JAX reference is faster (the
    #             kernel is launch-overhead bound); dispatch on n*c if it matters.

    kernel = functools.partial(
        _label_smoothing_kernel,
        confidence=confidence, smoothing=smoothing,
        n_rows=n, tile_n=tile_n, num_tiles=num_tiles)

    cost = pl.CostEstimate(
        flops=7 * n * c,
        transcendentals=n * c,
        bytes_accessed=n * c * x.dtype.itemsize + n * 4 + num_tiles * 8 * 128 * 4)

    partials = pl.pallas_call(
        kernel,
        out_shape=jax.ShapeDtypeStruct((num_tiles * 8, 128), jnp.float32),
        grid=(num_tiles,),
        in_specs=[
            pl.BlockSpec((tile_n, c), lambda i: (i, 0)),
            pl.BlockSpec((tile_n, 1), lambda i: (i, 0)),
        ],
        out_specs=pl.BlockSpec((8, 128), lambda i: (i, 0)),
        compiler_params=pltpu.CompilerParams(
            dimension_semantics=("parallel",),   # per-tile partials: no carry, so the
            vmem_limit_bytes=vmem_limit_bytes,   # batch axis megacore-shards on v7x
        ),
        cost_estimate=cost,
    )(x, tgt2d)

    # Tiny final reduction (one scalar per tile, embedded in zeroed blocks) in JAX.
    return jnp.sum(partials) * (1.0 / n)


def _reference(x, target, smoothing=0.01):
    confidence = 1.0 - smoothing
    logprobs = jax.nn.log_softmax(x.astype(jnp.float32), axis=-1)
    nll = -jnp.take_along_axis(logprobs, target[:, None].astype(jnp.int32), axis=-1)[:, 0]
    smooth = -jnp.mean(logprobs, axis=-1)
    return jnp.mean(confidence * nll + smoothing * smooth)


if __name__ == "__main__":
    # Case 1: single-tile path (batch=8, classes=32), matching the module's small use.
    key = jax.random.PRNGKey(0)
    kx, kt = jax.random.split(key)
    N, C = 8, 32
    x = jax.random.normal(kx, (N, C), dtype=jnp.float32)
    target = jax.random.randint(kt, (N,), 0, C, dtype=jnp.int32)

    loss = jax.block_until_ready(label_smoothing_loss(x, target, smoothing=0.01))
    ref = _reference(x, target, smoothing=0.01)
    assert jnp.allclose(loss, ref, atol=1e-5, rtol=1e-5), (loss, ref)

    # Case 2: multi-tile "parallel" path with a ragged last tile (batch=20, classes=128).
    kx2, kt2 = jax.random.split(jax.random.PRNGKey(0))
    N2, C2 = 20, 128
    x2 = jax.random.normal(kx2, (N2, C2), dtype=jnp.float32)
    target2 = jax.random.randint(kt2, (N2,), 0, C2, dtype=jnp.int32)

    loss2 = jax.block_until_ready(
        label_smoothing_loss(x2, target2, smoothing=0.01, tile_n=8))
    ref2 = _reference(x2, target2, smoothing=0.01)
    assert jnp.allclose(loss2, ref2, atol=1e-5, rtol=1e-5), (loss2, ref2)

    print("KERNEL_OK")
</pallas_src>

<mosaic_0001>
module attributes {stable_mosaic.version = 11 : i64} {
  func.func @_label_smoothing_kernel(%arg0: i32, %arg1: memref<8x32xf32, #tpu.memory_space<vmem>>, %arg2: memref<8x1xi32, #tpu.memory_space<vmem>>, %arg3: memref<8x128xf32, #tpu.memory_space<vmem>>) attributes {dimension_semantics = [#tpu.dimension_semantics<parallel>], iteration_bounds = array<i64: 1>, scalar_prefetch = 0 : i64, scratch_operands = 0 : i64, tpu.core_type = #tpu.core_type<tc>, window_params = [{transform_indices = @transform_0, window_bounds = array<i64: 8, 32>}, {transform_indices = @transform_1, window_bounds = array<i64: 8, 1>}, {transform_indices = @transform_2, window_bounds = array<i64: 8, 128>}]} {
    %c0 = arith.constant 0 : index
    %c0_0 = arith.constant 0 : index
    %0 = vector.load %arg1[%c0, %c0_0] : memref<8x32xf32, #tpu.memory_space<vmem>>, vector<8x32xf32>
    %c0_1 = arith.constant 0 : index
    %c0_2 = arith.constant 0 : index
    %1 = vector.load %arg2[%c0_1, %c0_2] : memref<8x1xi32, #tpu.memory_space<vmem>>, vector<8x1xi32>
    %cst = arith.constant dense<0xFF800000> : vector<8xf32>
    %2 = vector.multi_reduction <maximumf>, %0, %cst [1] : vector<8x32xf32> to vector<8xf32>
    %3 = vector.shape_cast %2 : vector<8xf32> to vector<8x1xf32>
    %4 = vector.broadcast %3 : vector<8x1xf32> to vector<8x32xf32>
    %5 = arith.subf %0, %4 : vector<8x32xf32>
    %6 = math.exp %5 : vector<8x32xf32>
    %cst_3 = arith.constant dense<0.000000e+00> : vector<8xf32>
    %7 = vector.multi_reduction <add>, %6, %cst_3 [1] : vector<8x32xf32> to vector<8xf32>
    %8 = vector.shape_cast %7 : vector<8xf32> to vector<8x1xf32>
    %9 = math.log %8 : vector<8x1xf32>
    %10 = arith.addf %9, %3 : vector<8x1xf32>
    %11 = tpu.iota {dimensions = array<i32: 1>} : vector<8x32xi32>
    %12 = vector.broadcast %1 : vector<8x1xi32> to vector<8x32xi32>
    %13 = arith.cmpi eq, %11, %12 : vector<8x32xi32>
    %cst_4 = arith.constant 0.990312516 : f32
    %cst_5 = arith.constant 3.125000e-04 : f32
    %14 = vector.broadcast %cst_4 : f32 to vector<8x32xf32>
    %15 = vector.broadcast %cst_5 : f32 to vector<8x32xf32>
    %16 = arith.select %13, %14, %15 : vector<8x32xi1>, vector<8x32xf32>
    %17 = arith.mulf %0, %16 : vector<8x32xf32>
    %cst_6 = arith.constant dense<0.000000e+00> : vector<8xf32>
    %18 = vector.multi_reduction <add>, %17, %cst_6 [1] : vector<8x32xf32> to vector<8xf32>
    %19 = vector.shape_cast %18 : vector<8xf32> to vector<8x1xf32>
    %20 = arith.subf %10, %19 : vector<8x1xf32>
    %21 = vector.shape_cast %20 : vector<8x1xf32> to vector<1x8x1xf32>
    %cst_7 = arith.constant dense<0.000000e+00> : vector<1xf32>
    %22 = vector.multi_reduction <add>, %21, %cst_7 [1, 2] : vector<1x8x1xf32> to vector<1xf32>
    %23 = vector.shape_cast %22 : vector<1xf32> to vector<1x1x1xf32>
    %24 = vector.extract %23[0, 0, 0] : f32 from vector<1x1x1xf32>
    %25 = vector.broadcast %24 : f32 to vector<1x1xf32>
    %cst_8 = arith.constant 0.000000e+00 : f32
    %26 = vector.broadcast %cst_8 : f32 to vector<8x128xf32>
    %c0_9 = arith.constant 0 : index
    %c0_10 = arith.constant 0 : index
    %27 = vector.load %arg3[%c0_9, %c0_10] : memref<8x128xf32, #tpu.memory_space<vmem>>, vector<8x128xf32>
    tpu.vector_store %arg3[%c0_9, %c0_10], %26 {strides = array<i32>} : memref<8x128xf32, #tpu.memory_space<vmem>>, vector<8x128xf32>,
    %c0_11 = arith.constant 0 : index
    %c0_12 = arith.constant 0 : index
    %28 = vector.load %arg3[%c0_11, %c0_12] : memref<8x128xf32, #tpu.memory_space<vmem>>, vector<1x1xf32>
    tpu.vector_store %arg3[%c0_11, %c0_12], %25 {strides = array<i32>} : memref<8x128xf32, #tpu.memory_space<vmem>>, vector<1x1xf32>,
    return
  }
  func.func @transform_0(%arg0: i32) -> (i32, i32) {
    %c0_i32 = arith.constant 0 : i32
    %c0_i32_0 = arith.constant 0 : i32
    return %arg0, %c0_i32 : i32, i32
  }
  func.func @transform_1(%arg0: i32) -> (i32, i32) {
    %c0_i32 = arith.constant 0 : i32
    %c0_i32_0 = arith.constant 0 : i32
    return %arg0, %c0_i32 : i32, i32
  }
  func.func @transform_2(%arg0: i32) -> (i32, i32) {
    %c0_i32 = arith.constant 0 : i32
    %c0_i32_0 = arith.constant 0 : i32
    return %arg0, %c0_i32 : i32, i32
  }
}

</mosaic_0001>

<llo_original>
// kernel: tpu_custom_call.1
$region0: #{tpu_custom_call.1}
  #allocation0 [shape = 'u32[]', space=smem, size = 0x4, offset = 0x4, fixed_abs, tag = 'smem constant byte address 0x4 - core index']
  #allocation1 [shape = 'u32[144,128]{1,0:T(1,128)}', space=vmem, size = 0x12000, scoped, tag = 'internal scratch']
  %s0 = inlined_call_operand.vmem [shape: f32[8,32], index: 0, kind: input, shape index: {}]
  %s1 = inlined_call_operand.vmem [shape: s32[8,1], index: 1, kind: input, shape index: {}]
  %s2 = inlined_call_operand.hbm [shape: f32[8,128], index: 2, kind: output, shape index: {}]
  %s3 = sld [smem:[#allocation0]]
  $region18: #{tpu_custom_call.1} parent=0
    _
  %s5 = ssub.s32 1, %s3
  %s6 = scalar_select 0, %s5, %s3
  $region1: #{tpu_custom_call.1} parent=0
    #allocation2 [shape = 'u8[4096]{0}', space=vmem, size = 0x1000, scoped, tag = 'output window, operand 0, single buffered']
    #allocation3 [shape = 's32[1]{0}', space=sflag, size = 0x4, scoped, tag = 'scoped memory for tpu_custom_call.1']
    %7 = vsyncpa [#allocation3], 0
    // Predicated region
    $region2: #{tpu_custom_call.1} parent=1 // pred_check
      _
    $region3: #{tpu_custom_call.1} parent=1 // pred_check_branch
      %9 = sbr.rel (0) target = $region5
    $region4: #{tpu_custom_call.1} parent=1 // pred_region
      _
    $region5: #{tpu_custom_call.1} parent=1 // pred_fallthru
      _
    // Predicated region
    $region6: #{tpu_custom_call.1} parent=1 // pred_check
      _
    $region7: #{tpu_custom_call.1} parent=1 // pred_check_branch
      %11 = sbr.rel (0) target = $region9
    $region8: #{tpu_custom_call.1} parent=1 // pred_region
      _
    $region9: #{tpu_custom_call.1} parent=1 // pred_fallthru
      _
    %v12 = vld [vmem:[%s0] sm:$0xff]
    %v13 = vld [vmem:[%s1] sm:$0xff]
    %vm14 = vcmask 261120
    %v15 = vsel %vm14, %v12, -inf
    %16 = vmax.xlane.f32.xlu0 %v15
    %v17 = vpop.xlane.xlu0 %16
    %v18 = vsub.f32 %v12, %v17
    %v19 = vmul.f32 %v18, 1.442695
    %v20 = vpow.pop %v19
    %v21 = vsel %vm14, %v20, 0.0
    %22 = vadd.xlane.f32.xlu0 %v21
    %v23 = vpop.xlane.xlu0 %22
    %v24 = vlog2.pop %v23
    %v25 = vmul.f32 %v24, 0.6931472
    %v26 = vadd.f32 %v25, %v17
    %v27 = vlaneseq
    %v28 = vand.u32 %v27, 127
    %29 = vset.pattern.permute.xlu0 0
    %30 = vperm.xlu0 %29, %v13
    %v31 = vpop.permute.xlu0 %30
    %vm32 = vcmp.eq.s32.totalorder %v28, %v31
    %v33 = vsel %vm32, 0.9903125, 0.0003125
    %v34 = vmul.f32 %v12, %v33
    %v35 = vsel %vm14, %v34, 0.0
    %36 = vadd.xlane.f32.xlu0 %v35
    %v37 = vpop.xlane.xlu0 %36
    %v38 = vsub.f32 %v26, %v37
    %vm39 = vcmask 7168
    %v40 = vsel %vm39, %v38, 0.0
    %41 = vadd.xlane.f32.xlu0 %v40
    %v42 = vpop.xlane.xlu0 %41
    %v43 = vrot.slane %v42, 4
    %v44 = vadd.f32 %v42, %v43
    %v45 = vrot.slane %v44, 2
    %v46 = vadd.f32 %v44, %v45
    %v47 = vrot.slane %v46, 1
    %v48 = vadd.f32 %v46, %v47
    %s49 = vtos %v48
    %v50 = vstv %s49
    %51 = vst [vmem:[#allocation2] sm:$0xff] 0.0
    %vm52 = vcmask 0
    %53 = vst.msk [vmem:[#allocation2] sm:$0x1] %vm52, %v50
    // Predicated region
    $region10: #{tpu_custom_call.1} parent=1 // pred_check
      _
    $region11: #{tpu_custom_call.1} parent=1 // pred_check_branch
      %55 = sbr.rel (0) target = $region13
    $region12: #{tpu_custom_call.1} parent=1 // pred_region
      %s57 = ssub.s32 128, 128
      %58 = vsyncadd [#allocation3], %s57
      %s60 = sshll.u32 [#allocation2], 4
      %s61 = int_to_ptr.vmem [resolvable:$true] %s60
      %63 = dma.vmem_to_hbm [thread:$0]  %s61, 128, %s2, [#allocation3]
    $region13: #{tpu_custom_call.1} parent=1 // pred_fallthru
      _
    // Predicated region
    $region14: #{tpu_custom_call.1} parent=1 // pred_check
      _
    $region15: #{tpu_custom_call.1} parent=1 // pred_check_branch
      %65 = sbr.rel (0) target = $region17
    $region16: #{tpu_custom_call.1} parent=1 // pred_region
      %66 = dma.done [#allocation3], 128
    $region17: #{tpu_custom_call.1} parent=1 // pred_fallthru
      _
    %67 = vsyncpa [#allocation3], 1

</llo_original>
